<compile_context>
chip_gen: v6e
topology: v6e:2x2x1
jax: 0.10.0
libtpu: 0.0.40
codegen_flags: <defaults>
</compile_context>

<pallas_src>
import functools

import jax
import jax.numpy as jnp
from jax import lax
from jax.experimental import pallas as pl
from jax.experimental.pallas import tpu as pltpu

# ---- synthetic config (mirrors cfg['mc'] / cfg['dc']) ----
HIDDEN = 768        # fixed by the module: nn.Linear(768, ...)
IHS = 256           # cfg['mc']['Ihs']
INTENT_NUM = 16     # cfg['dc']['intent_num']
SLOTS_NUM = 32      # cfg['dc']['slots_num']
JLC = 0.5           # cfg['mc']['joint_loss_coef']


def _gelu(x):
    # erf-based GELU, matches PyTorch F.gelu default.
    return jax.nn.gelu(x, approximate=False)


def _round_up(x, m):
    return ((x + m - 1) // m) * m


# ----------------------- slot head (streamed) kernel -------------------------
def slots_kernel(hidden_ref, stgt_ref, ws_ref, bs_ref, loss_ref, pred_ref, *,
                 n_tok, tile_tok):
    i = pl.program_id(0)
    x = hidden_ref[...]                                       # (T, 768) f32 tile
    # ReLU in f32 (v5e has no bf16 VALU); cast to bf16 only for the MXU feed.
    r = jnp.maximum(x, 0.0)                                   # slots_dropout = identity
    # bf16 x bf16 on the MXU, f32 accumulate; bias add + CE math in f32.
    slogits = jnp.dot(r.astype(jnp.bfloat16), ws_ref[...],
                      preferred_element_type=jnp.float32) + bs_ref[...]

    smax = jnp.max(slogits, axis=-1, keepdims=True)
    slse = smax + jnp.log(jnp.sum(jnp.exp(slogits - smax), axis=-1, keepdims=True))
    scol = lax.broadcasted_iota(jnp.int32, slogits.shape, 1)
    onehot = (scol == stgt_ref[...]).astype(jnp.float32)
    tgt_logit = jnp.sum(onehot * slogits, axis=-1, keepdims=True)
    per_tok = slse - tgt_logit                                # (T, 1)

    if n_tok % tile_tok != 0:                                 # mask ragged tail tokens
        tok_idx = i * tile_tok + lax.broadcasted_iota(jnp.int32, (tile_tok, 1), 0)
        per_tok = jnp.where(tok_idx < n_tok, per_tok, 0.0)

    # Per-block partial CE sum (no carried accumulator -> grid axis is 'parallel').
    loss_ref[0] = jnp.sum(per_tok, axis=0, keepdims=True)
    # softmax is monotonic -> argmax(softmax(x), -1) == argmax(x, -1) (first max idx)
    pred_ref[...] = jnp.min(jnp.where(slogits == smax, scol, jnp.int32(2 ** 30)),
                            axis=-1, keepdims=True)


# --------------------------------- wrapper -----------------------------------
def ic_ner_forward(hidden, intent_target, slots_target, params, jlc=JLC,
                   tile_tok=2048):
    """hidden: [B, S, 768] f32 (DistilBERT last_hidden_state)."""
    B, S, H = hidden.shape
    w1, b1, w2, b2, ws, bsl = params

    # ---- intent head: tiny (~0.4 MFLOP [CLS]-only), plain XLA per perf review
    #      (a single tiny custom call is pure launch/DMA overhead). ----
    cls = hidden[:, 0, :]                                     # (B, 768)
    h = _gelu(cls) @ w1 + b1                                  # intent_dropout_1 = identity
    intent_logits = _gelu(h) @ w2 + b2                        # intent_dropout_2 = identity
    itgt = intent_target.astype(jnp.int32)
    ilse = jax.nn.logsumexp(intent_logits, axis=-1)
    tgt_logit = jnp.take_along_axis(intent_logits, itgt[:, None], axis=-1)[:, 0]
    ic_loss = jnp.mean(ilse - tgt_logit)
    intent_pred = jnp.argmax(intent_logits, axis=-1).astype(jnp.int32)

    # ---- slot head: stream tokens through a 1-D "parallel" grid ----
    n_tok = B * S
    tile_tok = max(8, min(_round_up(tile_tok, 8), _round_up(n_tok, 8)))
    n_blocks = pl.cdiv(n_tok, tile_tok)

    # No dtype cast, no pad: stream the f32 hidden straight into the kernel.
    hidden_flat = hidden.reshape(n_tok, H)
    stgt = slots_target.astype(jnp.int32).reshape(n_tok, 1)
    n_slots = ws.shape[1]

    partial_sums, spred = pl.pallas_call(
        functools.partial(slots_kernel, n_tok=n_tok, tile_tok=tile_tok),
        grid=(n_blocks,),
        in_specs=[
            pl.BlockSpec((tile_tok, H), lambda i: (i, 0)),        # hidden tile (f32)
            pl.BlockSpec((tile_tok, 1), lambda i: (i, 0)),        # slot targets
            pl.BlockSpec((H, n_slots), lambda i: (0, 0)),         # slot weights (resident, bf16)
            pl.BlockSpec((1, n_slots), lambda i: (0, 0)),         # slot bias (resident, f32)
        ],
        out_specs=(
            pl.BlockSpec((1, 1, 1), lambda i: (i, 0, 0)),         # partial CE sums
            pl.BlockSpec((tile_tok, 1), lambda i: (i, 0)),        # slot preds
        ),
        out_shape=(
            jax.ShapeDtypeStruct((n_blocks, 1, 1), jnp.float32),
            jax.ShapeDtypeStruct((n_tok, 1), jnp.int32),
        ),
        compiler_params=pltpu.CompilerParams(
            dimension_semantics=("parallel",),
            vmem_limit_bytes=48 * 1024 * 1024,
        ),
        cost_estimate=pl.CostEstimate(
            flops=2 * n_tok * H * n_slots,
            transcendentals=n_tok * (n_slots + 1),
            bytes_accessed=(n_tok * H * 4            # hidden (f32 stream)
                            + n_tok * 4              # slot targets
                            + n_tok * 4              # slot preds
                            + n_blocks * 4           # partial sums
                            + H * n_slots * 2        # weights (bf16, resident)
                            + n_slots * 4),          # bias
        ),
    )(hidden_flat, stgt, ws.astype(jnp.bfloat16), bsl.reshape(1, -1))

    ner_loss = jnp.sum(partial_sums) / n_tok                  # finalize mean in XLA
    joint_loss = jlc * ic_loss + (1.0 - jlc) * ner_loss

    return {
        'joint_loss': joint_loss,
        'ic_loss': ic_loss,
        'ner_loss': ner_loss,
        'intent_pred': intent_pred,
        'slot_pred': spred[:, 0].reshape(B, S),
    }


def init_params(key):
    """Deterministic nn.Linear-style init (uniform +-1/sqrt(fan_in))."""
    keys = jax.random.split(key, 6)

    def linear(kw, kb, fan_in, fan_out):
        bound = fan_in ** -0.5
        w = jax.random.uniform(kw, (fan_in, fan_out), jnp.float32, -bound, bound)
        b = jax.random.uniform(kb, (fan_out,), jnp.float32, -bound, bound)
        return w, b

    w1, b1 = linear(keys[0], keys[1], HIDDEN, IHS)          # intent_FC1
    w2, b2 = linear(keys[2], keys[3], IHS, INTENT_NUM)      # intent_FC2
    ws, bsl = linear(keys[4], keys[5], HIDDEN, SLOTS_NUM)   # slots_FC
    return w1, b1, w2, b2, ws, bsl


def ref_forward(hidden, itgt, stgt, params, jlc=JLC):
    """Pure-JAX (f32) reference for a correctness sanity check."""
    w1, b1, w2, b2, ws, bsl = params
    cls = hidden[:, 0, :]
    h = _gelu(cls) @ w1 + b1
    ilogits = _gelu(h) @ w2 + b2
    ic = jnp.mean(-jax.nn.log_softmax(ilogits)[jnp.arange(ilogits.shape[0]), itgt])
    slogits = (jax.nn.relu(hidden) @ ws + bsl).reshape(-1, SLOTS_NUM)
    ner = jnp.mean(-jax.nn.log_softmax(slogits)[jnp.arange(slogits.shape[0]),
                                                stgt.reshape(-1)])
    return jlc * ic + (1.0 - jlc) * ner, ic, ner


if __name__ == "__main__":
    key = jax.random.PRNGKey(0)
    kh, ki, ks, kp = jax.random.split(key, 4)

    B, S = 2, 16
    hidden = jax.random.normal(kh, (B, S, HIDDEN), jnp.float32)
    intent_target = jax.random.randint(ki, (B,), 0, INTENT_NUM)
    slots_target = jax.random.randint(ks, (B, S), 0, SLOTS_NUM)
    params = init_params(kp)

    # tile_tok=16 -> 2 grid steps at these demo shapes (exercises the pipeline).
    out = ic_ner_forward(hidden, intent_target, slots_target, params, tile_tok=16)
    out = jax.block_until_ready(out)

    # sanity check against plain-JAX f32 reference
    # (loose tol: bf16 MXU slot matmul; intent head is exact f32/erf-GELU).
    ref_joint, ref_ic, ref_ner = ref_forward(hidden, intent_target, slots_target, params)
    assert jnp.allclose(out['ic_loss'], ref_ic, rtol=1e-4, atol=1e-4)
    assert jnp.allclose(out['ner_loss'], ref_ner, rtol=3e-2, atol=3e-2)
    assert jnp.allclose(out['joint_loss'], ref_joint, rtol=3e-2, atol=3e-2)
    assert out['intent_pred'].shape == (B,)
    assert out['slot_pred'].shape == (B, S)

    print("KERNEL_OK")
</pallas_src>

<mosaic_0001>
module attributes {stable_mosaic.version = 11 : i64} {
  func.func @slots_kernel(%arg0: i32, %arg1: memref<16x768xf32, #tpu.memory_space<vmem>>, %arg2: memref<16x1xi32, #tpu.memory_space<vmem>>, %arg3: memref<768x32xbf16, #tpu.memory_space<vmem>>, %arg4: memref<1x32xf32, #tpu.memory_space<vmem>>, %arg5: memref<1x1x1xf32, #tpu.memory_space<vmem>>, %arg6: memref<16x1xi32, #tpu.memory_space<vmem>>) attributes {dimension_semantics = [#tpu.dimension_semantics<parallel>], iteration_bounds = array<i64: 2>, scalar_prefetch = 0 : i64, scratch_operands = 0 : i64, tpu.core_type = #tpu.core_type<tc>, window_params = [{transform_indices = @transform_0, window_bounds = array<i64: 16, 768>}, {transform_indices = @transform_1, window_bounds = array<i64: 16, 1>}, {pipeline_mode = #tpu.pipeline_mode<synchronous>, transform_indices = @transform_2, window_bounds = array<i64: 768, 32>}, {pipeline_mode = #tpu.pipeline_mode<synchronous>, transform_indices = @transform_3, window_bounds = array<i64: 1, 32>}, {transform_indices = @transform_4, window_bounds = array<i64: 1, 1, 1>}, {transform_indices = @transform_5, window_bounds = array<i64: 16, 1>}]} {
    %c0 = arith.constant 0 : index
    %c0_0 = arith.constant 0 : index
    %0 = vector.load %arg1[%c0, %c0_0] : memref<16x768xf32, #tpu.memory_space<vmem>>, vector<16x768xf32>
    %cst = arith.constant 0.000000e+00 : f32
    %1 = vector.broadcast %cst : f32 to vector<16x768xf32>
    %2 = arith.maximumf %0, %1 : vector<16x768xf32>
    %3 = arith.truncf %2 : vector<16x768xf32> to vector<16x768xbf16>
    %c0_1 = arith.constant 0 : index
    %c0_2 = arith.constant 0 : index
    %4 = vector.load %arg3[%c0_1, %c0_2] : memref<768x32xbf16, #tpu.memory_space<vmem>>, vector<768x32xbf16>
    %cst_3 = arith.constant dense<0.000000e+00> : vector<16x32xf32>
    %5 = tpu.matmul %3, %4, %cst_3 {dimension_numbers = #tpu.dot_dimension_numbers<[1], [0], [0], [1], [0, 0, 1, 1], [], []>} : vector<16x768xbf16>, vector<768x32xbf16>, vector<16x32xf32> -> vector<16x32xf32>
    %c0_4 = arith.constant 0 : index
    %c0_5 = arith.constant 0 : index
    %6 = vector.load %arg4[%c0_4, %c0_5] : memref<1x32xf32, #tpu.memory_space<vmem>>, vector<1x32xf32>
    %7 = vector.broadcast %6 : vector<1x32xf32> to vector<16x32xf32>
    %8 = arith.addf %5, %7 : vector<16x32xf32>
    %cst_6 = arith.constant dense<0xFF800000> : vector<16xf32>
    %9 = vector.multi_reduction <maximumf>, %8, %cst_6 [1] : vector<16x32xf32> to vector<16xf32>
    %10 = vector.shape_cast %9 : vector<16xf32> to vector<16x1xf32>
    %11 = vector.broadcast %10 : vector<16x1xf32> to vector<16x32xf32>
    %12 = arith.subf %8, %11 : vector<16x32xf32>
    %13 = math.exp %12 : vector<16x32xf32>
    %cst_7 = arith.constant dense<0.000000e+00> : vector<16xf32>
    %14 = vector.multi_reduction <add>, %13, %cst_7 [1] : vector<16x32xf32> to vector<16xf32>
    %15 = vector.shape_cast %14 : vector<16xf32> to vector<16x1xf32>
    %16 = math.log %15 : vector<16x1xf32>
    %17 = arith.addf %10, %16 : vector<16x1xf32>
    %18 = tpu.iota {dimensions = array<i32: 1>} : vector<16x32xi32>
    %c0_8 = arith.constant 0 : index
    %c0_9 = arith.constant 0 : index
    %19 = vector.load %arg2[%c0_8, %c0_9] : memref<16x1xi32, #tpu.memory_space<vmem>>, vector<16x1xi32>
    %20 = vector.broadcast %19 : vector<16x1xi32> to vector<16x32xi32>
    %21 = arith.cmpi eq, %18, %20 : vector<16x32xi32>
    %22 = arith.extui %21 : vector<16x32xi1> to vector<16x32xi32>
    %23 = arith.sitofp %22 : vector<16x32xi32> to vector<16x32xf32>
    %24 = arith.mulf %23, %8 : vector<16x32xf32>
    %cst_10 = arith.constant dense<0.000000e+00> : vector<16xf32>
    %25 = vector.multi_reduction <add>, %24, %cst_10 [1] : vector<16x32xf32> to vector<16xf32>
    %26 = vector.shape_cast %25 : vector<16xf32> to vector<16x1xf32>
    %27 = arith.subf %17, %26 : vector<16x1xf32>
    %cst_11 = arith.constant dense<0.000000e+00> : vector<1xf32>
    %28 = vector.multi_reduction <add>, %27, %cst_11 [0] : vector<16x1xf32> to vector<1xf32>
    %29 = vector.shape_cast %28 : vector<1xf32> to vector<1x1xf32>
    %c0_12 = arith.constant 0 : index
    %c0_13 = arith.constant 0 : index
    %c0_14 = arith.constant 0 : index
    %30 = vector.load %arg5[%c0_12, %c0_13, %c0_14] : memref<1x1x1xf32, #tpu.memory_space<vmem>>, vector<1x1x1xf32>
    %31 = vector.shape_cast %30 : vector<1x1x1xf32> to vector<1x1xf32>
    %32 = vector.shape_cast %29 : vector<1x1xf32> to vector<1x1x1xf32>
    tpu.vector_store %arg5[%c0_12, %c0_13, %c0_14], %32 {strides = array<i32>} : memref<1x1x1xf32, #tpu.memory_space<vmem>>, vector<1x1x1xf32>,
    %33 = vector.broadcast %10 : vector<16x1xf32> to vector<16x32xf32>
    %34 = arith.cmpf oeq, %8, %33 : vector<16x32xf32>
    %c1073741824_i32 = arith.constant 1073741824 : i32
    %35 = vector.broadcast %c1073741824_i32 : i32 to vector<16x32xi32>
    %36 = arith.select %34, %18, %35 : vector<16x32xi1>, vector<16x32xi32>
    %cst_15 = arith.constant dense<2147483647> : vector<16xi32>
    %37 = vector.multi_reduction <minsi>, %36, %cst_15 [1] : vector<16x32xi32> to vector<16xi32>
    %38 = vector.shape_cast %37 : vector<16xi32> to vector<16x1xi32>
    %c0_16 = arith.constant 0 : index
    %c0_17 = arith.constant 0 : index
    %39 = vector.load %arg6[%c0_16, %c0_17] : memref<16x1xi32, #tpu.memory_space<vmem>>, vector<16x1xi32>
    tpu.vector_store %arg6[%c0_16, %c0_17], %38 {strides = array<i32>} : memref<16x1xi32, #tpu.memory_space<vmem>>, vector<16x1xi32>,
    return
  }
  func.func @transform_0(%arg0: i32) -> (i32, i32) {
    %c0_i32 = arith.constant 0 : i32
    %c0_i32_0 = arith.constant 0 : i32
    return %arg0, %c0_i32 : i32, i32
  }
  func.func @transform_1(%arg0: i32) -> (i32, i32) {
    %c0_i32 = arith.constant 0 : i32
    %c0_i32_0 = arith.constant 0 : i32
    return %arg0, %c0_i32 : i32, i32
  }
  func.func @transform_2(%arg0: i32) -> (i32, i32) {
    %c0_i32 = arith.constant 0 : i32
    %c0_i32_0 = arith.constant 0 : i32
    %c0_i32_1 = arith.constant 0 : i32
    return %c0_i32, %c0_i32_0 : i32, i32
  }
  func.func @transform_3(%arg0: i32) -> (i32, i32) {
    %c0_i32 = arith.constant 0 : i32
    %c0_i32_0 = arith.constant 0 : i32
    %c0_i32_1 = arith.constant 0 : i32
    return %c0_i32, %c0_i32_0 : i32, i32
  }
  func.func @transform_4(%arg0: i32) -> (i32, i32, i32) {
    %c0_i32 = arith.constant 0 : i32
    %c0_i32_0 = arith.constant 0 : i32
    %c0_i32_1 = arith.constant 0 : i32
    return %arg0, %c0_i32, %c0_i32_0 : i32, i32, i32
  }
  func.func @transform_5(%arg0: i32) -> (i32, i32) {
    %c0_i32 = arith.constant 0 : i32
    %c0_i32_0 = arith.constant 0 : i32
    return %arg0, %c0_i32 : i32, i32
  }
}

</mosaic_0001>

<llo_original>
// kernel: tpu_custom_call.1
$region0: #{tpu_custom_call.1}
  #allocation0 [shape = 'u32[]', space=smem, size = 0x4, offset = 0x4, fixed_abs, tag = 'smem constant byte address 0x4 - core index']
  #allocation1 [shape = 'u32[144,128]{1,0:T(1,128)}', space=vmem, size = 0x12000, scoped, tag = 'internal scratch']
  %s0 = inlined_call_operand.vmem [shape: f32[32,768], index: 0, kind: input, shape index: {}]
  %s1 = inlined_call_operand.vmem [shape: s32[32,1], index: 1, kind: input, shape index: {}]
  %s2 = inlined_call_operand.vmem [shape: bf16[768,32], index: 2, kind: input, shape index: {}]
  %s3 = inlined_call_operand.vmem [shape: f32[1,32], index: 3, kind: input, shape index: {}]
  %s4 = inlined_call_operand.vmem [shape: f32[2,1,1], index: 4, kind: output, shape index: {0}]
  %s5 = inlined_call_operand.vmem [shape: s32[32,1], index: 5, kind: output, shape index: {1}]
  %6 = xla_tuple %s4, %s5
  %s7 = sld [smem:[#allocation0]]
  $region57: #{tpu_custom_call.1} parent=0
    _
  %s9 = ssub.s32 1, %s7
  %s10 = scalar_select 0, %s9, %s7
  loop: start=0, step=1, limit=4
  $region2: #{tpu_custom_call.1} parent=0 // loop_pre_header
    _
  $region3: #{tpu_custom_call.1} parent=0 // loop_header
    %s12 = sphi 0, %s16
    %p13 = scmp.ge.s32.totalorder %s12, 4
    %s22 = sphi 0, %s24
    %s25 = sphi 0, %s22
    %s26 = sphi 0, %s25
    %s42 = sphi 0, %s26
    %s48 = sphi 0, %s50
    %s51 = sphi 0, %s48
    %s52 = sphi 0, %s51
    %s68 = sphi 0, %s52
    %s72 = sphi 0, %s72
    %s74 = sphi 0, %s72
    %s75 = sphi 0, %s74
    %s89 = sphi 0, %s75
    %s93 = sphi 0, %s93
    %s95 = sphi 0, %s93
    %s96 = sphi 0, %s95
    %s110 = sphi 0, %s96
    %s116 = sphi 0, %s118
    %s119 = sphi 0, %s116
    %s120 = sphi 0, %s119
    %s136 = sphi 0, %s120
    %s142 = sphi 0, %s144
    %s145 = sphi 0, %s142
    %s146 = sphi 0, %s145
    %s162 = sphi 0, %s146
  $region4: #{tpu_custom_call.1} parent=0 // loop_header_branch
    %15 = sbr.rel (%p13) target = $region8
  $region5: #{tpu_custom_call.1} parent=0 // loop_body
    %s17 = ssub.s32 %s12, 1
    %s18 = ssub.s32 %s12, 2
    %s19 = sadd.s32 %s12, 1
    %s20 = ssub.s32 %s12, %s19
    %p21 = scmp.eq.s32.totalorder %s20, 0
    %s23 = sadd.s32 %s22, 1
    %s24 = scalar_select %p21, %s22, %s23
    %p27 = pneg %p21
    %p28 = scmp.eq.s32.totalorder %s12, 1
    %p29 = por %p27, %p28
    %p30 = scmp.ne.s32.totalorder %s22, %s25
    %p31 = scmp.eq.s32.totalorder %s12, 0
    %p32 = por %p30, %p31
    %p33 = scmp.ne.s32.totalorder %s22, %s25
    %p34 = scmp.eq.s32.totalorder %s17, 1
    %p35 = por %p33, %p34
    %p36 = scmp.ne.s32.totalorder %s25, %s26
    %p37 = scmp.eq.s32.totalorder %s17, 0
    %p38 = por %p36, %p37
    %p39 = scmp.ne.s32.totalorder %s25, %s26
    %p40 = scmp.eq.s32.totalorder %s18, 1
    %p41 = por %p39, %p40
    %p43 = scmp.ne.s32.totalorder %s26, %s42
    %p44 = scmp.eq.s32.totalorder %s18, 0
    %p45 = por %p43, %p44
    %s46 = ssub.s32 %s12, %s19
    %p47 = scmp.eq.s32.totalorder %s46, 0
    %s49 = sadd.s32 %s48, 1
    %s50 = scalar_select %p47, %s48, %s49
    %p53 = pneg %p47
    %p54 = scmp.eq.s32.totalorder %s12, 1
    %p55 = por %p53, %p54
    %p56 = scmp.ne.s32.totalorder %s48, %s51
    %p57 = scmp.eq.s32.totalorder %s12, 0
    %p58 = por %p56, %p57
    %p59 = scmp.ne.s32.totalorder %s48, %s51
    %p60 = scmp.eq.s32.totalorder %s17, 1
    %p61 = por %p59, %p60
    %p62 = scmp.ne.s32.totalorder %s51, %s52
    %p63 = scmp.eq.s32.totalorder %s17, 0
    %p64 = por %p62, %p63
    %p65 = scmp.ne.s32.totalorder %s51, %s52
    %p66 = scmp.eq.s32.totalorder %s18, 1
    %p67 = por %p65, %p66
    %p69 = scmp.ne.s32.totalorder %s52, %s68
    %p70 = scmp.eq.s32.totalorder %s18, 0
    %p71 = por %p69, %p70
    %s73 = sadd.s32 %s72, 1
    %p76 = scmp.eq.s32.totalorder %s12, 1
    %p77 = scmp.ne.s32.totalorder %s72, %s74
    %p78 = scmp.eq.s32.totalorder %s12, 0
    %p79 = por %p77, %p78
    %p80 = scmp.ne.s32.totalorder %s72, %s74
    %p81 = scmp.eq.s32.totalorder %s17, 1
    %p82 = por %p80, %p81
    %p83 = scmp.ne.s32.totalorder %s74, %s75
    %p84 = scmp.eq.s32.totalorder %s17, 0
    %p85 = por %p83, %p84
    %p86 = scmp.ne.s32.totalorder %s74, %s75
    %p87 = scmp.eq.s32.totalorder %s18, 1
    %p88 = por %p86, %p87
    %p90 = scmp.ne.s32.totalorder %s75, %s89
    %p91 = scmp.eq.s32.totalorder %s18, 0
    %p92 = por %p90, %p91
    %s94 = sadd.s32 %s93, 1
    %p97 = scmp.eq.s32.totalorder %s12, 1
    %p98 = scmp.ne.s32.totalorder %s93, %s95
    %p99 = scmp.eq.s32.totalorder %s12, 0
    %p100 = por %p98, %p99
    %p101 = scmp.ne.s32.totalorder %s93, %s95
    %p102 = scmp.eq.s32.totalorder %s17, 1
    %p103 = por %p101, %p102
    %p104 = scmp.ne.s32.totalorder %s95, %s96
    %p105 = scmp.eq.s32.totalorder %s17, 0
    %p106 = por %p104, %p105
    %p107 = scmp.ne.s32.totalorder %s95, %s96
    %p108 = scmp.eq.s32.totalorder %s18, 1
    %p109 = por %p107, %p108
    %p111 = scmp.ne.s32.totalorder %s96, %s110
    %p112 = scmp.eq.s32.totalorder %s18, 0
    %p113 = por %p111, %p112
    %s114 = ssub.s32 %s12, %s19
    %p115 = scmp.eq.s32.totalorder %s114, 0
    %s117 = sadd.s32 %s116, 1
    %s118 = scalar_select %p115, %s116, %s117
    %p121 = pneg %p115
    %p122 = scmp.eq.s32.totalorder %s12, 1
    %p123 = por %p121, %p122
    %p124 = scmp.ne.s32.totalorder %s116, %s119
    %p125 = scmp.eq.s32.totalorder %s12, 0
    %p126 = por %p124, %p125
    %p127 = scmp.ne.s32.totalorder %s116, %s119
    %p128 = scmp.eq.s32.totalorder %s17, 1
    %p129 = por %p127, %p128
    %p130 = scmp.ne.s32.totalorder %s119, %s120
    %p131 = scmp.eq.s32.totalorder %s17, 0
    %p132 = por %p130, %p131
    %p133 = scmp.ne.s32.totalorder %s119, %s120
    %p134 = scmp.eq.s32.totalorder %s18, 1
    %p135 = por %p133, %p134
    %p137 = scmp.ne.s32.totalorder %s120, %s136
    %p138 = scmp.eq.s32.totalorder %s18, 0
    %p139 = por %p137, %p138
    %s140 = ssub.s32 %s12, %s19
    %p141 = scmp.eq.s32.totalorder %s140, 0
    %s143 = sadd.s32 %s142, 1
    %s144 = scalar_select %p141, %s142, %s143
    %p147 = pneg %p141
    %p148 = scmp.eq.s32.totalorder %s12, 1
    %p149 = por %p147, %p148
    %p150 = scmp.ne.s32.totalorder %s142, %s145
    %p151 = scmp.eq.s32.totalorder %s12, 0
    %p152 = por %p150, %p151
    %p153 = scmp.ne.s32.totalorder %s142, %s145
    %p154 = scmp.eq.s32.totalorder %s17, 1
    %p155 = por %p153, %p154
    %p156 = scmp.ne.s32.totalorder %s145, %s146
    %p157 = scmp.eq.s32.totalorder %s17, 0
    %p158 = por %p156, %p157
    %p159 = scmp.ne.s32.totalorder %s145, %s146
    %p160 = scmp.eq.s32.totalorder %s18, 1
    %p161 = por %p159, %p160
    %p163 = scmp.ne.s32.totalorder %s146, %s162
    %p164 = scmp.eq.s32.totalorder %s18, 0
    %p165 = por %p163, %p164
    %p166 = scmp.le.s32.totalorder 1, %s12
    %p167 = scmp.lt.s32.totalorder %s12, 3
    %p168 = pnand %p166, %p167
    %p169 = pneg %p168
    // Predicated region
    $region9: #{tpu_custom_call.1} parent=5 // pred_check
      _
    $region10: #{tpu_custom_call.1} parent=5 // pred_check_branch
      %171 = sbr.rel (%p168) target = $region12
    $region11: #{tpu_custom_call.1} parent=5 // pred_region
      %s172 = ssub.s32 %s12, 1
      // Predicated region
      $region13: #{tpu_custom_call.1} parent=11 // pred_check
        %p173 = pneg %p85
      $region14: #{tpu_custom_call.1} parent=11 // pred_check_branch
        %175 = sbr.rel (%p173) target = $region16
      $region15: #{tpu_custom_call.1} parent=11 // pred_region
        _
      $region16: #{tpu_custom_call.1} parent=11 // pred_fallthru
        _
      // Predicated region
      $region17: #{tpu_custom_call.1} parent=11 // pred_check
        %p176 = pneg %p106
      $region18: #{tpu_custom_call.1} parent=11 // pred_check_branch
        %178 = sbr.rel (%p176) target = $region20
      $region19: #{tpu_custom_call.1} parent=11 // pred_region
        _
      $region20: #{tpu_custom_call.1} parent=11 // pred_fallthru
        _
    $region12: #{tpu_custom_call.1} parent=5 // pred_fallthru
      _
    %p179 = scmp.lt.s32.totalorder %s12, 2
    // Predicated region
    $region21: #{tpu_custom_call.1} parent=5 // pred_check
      %p180 = pneg %p179
    $region22: #{tpu_custom_call.1} parent=5 // pred_check_branch
      %182 = sbr.rel (%p180) target = $region24
    $region23: #{tpu_custom_call.1} parent=5 // pred_region
      // Predicated region
      $region25: #{tpu_custom_call.1} parent=23 // pred_check
        %p183 = pneg %p32
      $region26: #{tpu_custom_call.1} parent=23 // pred_check_branch
        %185 = sbr.rel (%p183) target = $region28
      $region27: #{tpu_custom_call.1} parent=23 // pred_region
        %s186 = smul.u32 2, %s12
        %p187 = scmp.lt.s32.totalorder %s186, 3
        %s188 = scalar_select %p187, %s186, 3
        %s189 = smul.addr %s188, 6
        %s190 = smul.addr %s189, 8
        %s191 = scalar_lea.vmem %s0, %s190
        %s192 = smul.u32 2, %s12
      $region28: #{tpu_custom_call.1} parent=23 // pred_fallthru
        _
      // Predicated region
      $region29: #{tpu_custom_call.1} parent=23 // pred_check
        %p193 = pneg %p58
      $region30: #{tpu_custom_call.1} parent=23 // pred_check_branch
        %195 = sbr.rel (%p193) target = $region32
      $region31: #{tpu_custom_call.1} parent=23 // pred_region
        %s196 = smul.u32 2, %s12
        %p197 = scmp.lt.s32.totalorder %s196, 3
        %s198 = scalar_select %p197, %s196, 3
        %s199 = smul.addr %s198, 8
        %s200 = scalar_lea.vmem %s1, %s199
        %s201 = smul.u32 2, %s12
      $region32: #{tpu_custom_call.1} parent=23 // pred_fallthru
        _
    $region24: #{tpu_custom_call.1} parent=5 // pred_fallthru
      _
    %p202 = scmp.le.s32.totalorder 1, %s12
    %p203 = scmp.lt.s32.totalorder %s12, 3
    %p204 = pnand %p202, %p203
    %p205 = pneg %p204
    // Predicated region
    $region33: #{tpu_custom_call.1} parent=5 // pred_check
      _
    $region34: #{tpu_custom_call.1} parent=5 // pred_check_branch
      %207 = sbr.rel (%p204) target = $region36
    $region35: #{tpu_custom_call.1} parent=5 // pred_region
      %s208 = ssub.s32 %s12, 1
      %s209 = smul.u32 2, %s17
      %p210 = scmp.lt.s32.totalorder %s209, 3
      %s211 = scalar_select %p210, %s209, 3
      %s212 = smul.addr %s211, 6
      %s213 = smul.addr %s212, 8
      %s214 = scalar_lea.vmem %s0, %s213
      %p215 = pneg %p38
      %p216 = pneg %p35
      %s217 = smul.u32 2, %s17
      %p218 = scmp.lt.s32.totalorder %s217, 3
      %s219 = scalar_select %p218, %s217, 3
      %s220 = smul.addr %s219, 8
      %s221 = scalar_lea.vmem %s1, %s220
      %p222 = pneg %p64
      %p223 = pneg %p61
      %p224 = pneg %p85
      %p225 = pneg %p82
      %p226 = pneg %p106
      %p227 = pneg %p103
      %p228 = pneg %p132
      %p229 = pneg %p129
      %p230 = scmp.lt.s32.totalorder %s17, 1
      %s231 = scalar_select %p230, %s17, 1
      %s232 = scalar_lea.vmem %s4, %s231
      %p233 = pneg %p158
      %p234 = pneg %p155
      %s235 = smul.u32 2, %s17
      %p236 = scmp.lt.s32.totalorder %s235, 3
      %s237 = scalar_select %p236, %s235, 3
      %s238 = smul.addr %s237, 8
      %s239 = scalar_lea.vmem %s5, %s238
      %s240 = smul.u32 2, %s17
      %p241 = scmp.lt.s32.totalorder %s240, 3
      %s242 = scalar_select %p241, %s240, 3
      %s243 = smul.addr %s242, 6
      %s244 = smul.addr %s243, 8
      %s245 = scalar_lea.vmem %s0, %s244
      %s246 = smul.u32 2, %s17
      %s247 = smul.u32 2, %s17
      %p248 = scmp.lt.s32.totalorder %s247, 3
      %s249 = scalar_select %p248, %s247, 3
      %s250 = smul.addr %s249, 8
      %s251 = scalar_lea.vmem %s1, %s250
      %s252 = smul.u32 2, %s17
      %p253 = scmp.lt.s32.totalorder %s17, 1
      %s254 = scalar_select %p253, %s17, 1
      %s255 = scalar_lea.vmem %s4, %s254
      %s256 = smul.u32 2, %s17
      %p257 = scmp.lt.s32.totalorder %s256, 3
      %s258 = scalar_select %p257, %s256, 3
      %s259 = smul.addr %s258, 8
      %s260 = scalar_lea.vmem %s5, %s259
      %s261 = smul.u32 2, %s17
      %v263 = vld [vmem:[%s245] sm:$0xff]
      %v264 = vld [vmem:[%s245 + $0x8] sm:$0xff]
      %v265 = vld [vmem:[%s245 + $0x10] sm:$0xff]
      %v266 = vld [vmem:[%s245 + $0x18] sm:$0xff]
      %v267 = vld [vmem:[%s245 + $0x20] sm:$0xff]
      %v268 = vld [vmem:[%s245 + $0x28] sm:$0xff]
      %v269 = vld [vmem:[%s245 + $0x30] sm:$0xff]
      %v270 = vld [vmem:[%s245 + $0x38] sm:$0xff]
      %v271 = vld [vmem:[%s245 + $0x40] sm:$0xff]
      %v272 = vld [vmem:[%s245 + $0x48] sm:$0xff]
      %v273 = vld [vmem:[%s245 + $0x50] sm:$0xff]
      %v274 = vld [vmem:[%s245 + $0x58] sm:$0xff]
      %v275 = vmax.f32 %v263, 0.0
      %v276 = vmax.f32 %v264, 0.0
      %v277 = vmax.f32 %v265, 0.0
      %v278 = vmax.f32 %v266, 0.0
      %v279 = vmax.f32 %v267, 0.0
      %v280 = vmax.f32 %v268, 0.0
      %v281 = vmax.f32 %v269, 0.0
      %v282 = vmax.f32 %v270, 0.0
      %v283 = vmax.f32 %v271, 0.0
      %v284 = vmax.f32 %v272, 0.0
      %v285 = vmax.f32 %v273, 0.0
      %v286 = vmax.f32 %v274, 0.0
      %v287 = vpack.c.bf16 %v281, %v275
      %v288 = vpack.c.bf16 %v282, %v276
      %v289 = vpack.c.bf16 %v283, %v277
      %v290 = vpack.c.bf16 %v284, %v278
      %v291 = vpack.c.bf16 %v285, %v279
      %v292 = vpack.c.bf16 %v286, %v280
      %v293 = vld [vmem:[%s2] sm:$0xf]
      %v294 = vld [vmem:[%s2 + $0x4] sm:$0xf]
      %v295 = vld [vmem:[%s2 + $0x8] sm:$0xf]
      %v296 = vld [vmem:[%s2 + $0xc] sm:$0xf]
      %v297 = vld [vmem:[%s2 + $0x10] sm:$0xf]
      %v298 = vld [vmem:[%s2 + $0x14] sm:$0xf]
      %v299 = vld [vmem:[%s2 + $0x18] sm:$0xf]
      %v300 = vld [vmem:[%s2 + $0x1c] sm:$0xf]
      %v301 = vld [vmem:[%s2 + $0x20] sm:$0xf]
      %v302 = vld [vmem:[%s2 + $0x24] sm:$0xf]
      %v303 = vld [vmem:[%s2 + $0x28] sm:$0xf]
      %v304 = vld [vmem:[%s2 + $0x2c] sm:$0xf]
      %v305 = vld [vmem:[%s2 + $0x30] sm:$0xf]
      %v306 = vld [vmem:[%s2 + $0x34] sm:$0xf]
      %v307 = vld [vmem:[%s2 + $0x38] sm:$0xf]
      %v308 = vld [vmem:[%s2 + $0x3c] sm:$0xf]
      %v309 = vld [vmem:[%s2 + $0x40] sm:$0xf]
      %v310 = vld [vmem:[%s2 + $0x44] sm:$0xf]
      %v311 = vld [vmem:[%s2 + $0x48] sm:$0xf]
      %v312 = vld [vmem:[%s2 + $0x4c] sm:$0xf]
      %v313 = vld [vmem:[%s2 + $0x50] sm:$0xf]
      %v314 = vld [vmem:[%s2 + $0x54] sm:$0xf]
      %v315 = vld [vmem:[%s2 + $0x58] sm:$0xf]
      %v316 = vld [vmem:[%s2 + $0x5c] sm:$0xf]
      %v317 = vld [vmem:[%s2 + $0x60] sm:$0xf]
      %v318 = vld [vmem:[%s2 + $0x64] sm:$0xf]
      %v319 = vld [vmem:[%s2 + $0x68] sm:$0xf]
      %v320 = vld [vmem:[%s2 + $0x6c] sm:$0xf]
      %v321 = vld [vmem:[%s2 + $0x70] sm:$0xf]
      %v322 = vld [vmem:[%s2 + $0x74] sm:$0xf]
      %v323 = vld [vmem:[%s2 + $0x78] sm:$0xf]
      %v324 = vld [vmem:[%s2 + $0x7c] sm:$0xf]
      %v325 = vld [vmem:[%s2 + $0x80] sm:$0xf]
      %v326 = vld [vmem:[%s2 + $0x84] sm:$0xf]
      %v327 = vld [vmem:[%s2 + $0x88] sm:$0xf]
      %v328 = vld [vmem:[%s2 + $0x8c] sm:$0xf]
      %v329 = vld [vmem:[%s2 + $0x90] sm:$0xf]
      %v330 = vld [vmem:[%s2 + $0x94] sm:$0xf]
      %v331 = vld [vmem:[%s2 + $0x98] sm:$0xf]
      %v332 = vld [vmem:[%s2 + $0x9c] sm:$0xf]
      %v333 = vld [vmem:[%s2 + $0xa0] sm:$0xf]
      %v334 = vld [vmem:[%s2 + $0xa4] sm:$0xf]
      %v335 = vld [vmem:[%s2 + $0xa8] sm:$0xf]
      %v336 = vld [vmem:[%s2 + $0xac] sm:$0xf]
      %v337 = vld [vmem:[%s2 + $0xb0] sm:$0xf]
      %v338 = vld [vmem:[%s2 + $0xb4] sm:$0xf]
      %v339 = vld [vmem:[%s2 + $0xb8] sm:$0xf]
      %v340 = vld [vmem:[%s2 + $0xbc] sm:$0xf]
      %v341 = vld [vmem:[%s2 + $0xc0] sm:$0xf]
      %v342 = vld [vmem:[%s2 + $0xc4] sm:$0xf]
      %v343 = vld [vmem:[%s2 + $0xc8] sm:$0xf]
      %v344 = vld [vmem:[%s2 + $0xcc] sm:$0xf]
      %v345 = vld [vmem:[%s2 + $0xd0] sm:$0xf]
      %v346 = vld [vmem:[%s2 + $0xd4] sm:$0xf]
      %v347 = vld [vmem:[%s2 + $0xd8] sm:$0xf]
      %v348 = vld [vmem:[%s2 + $0xdc] sm:$0xf]
      %v349 = vld [vmem:[%s2 + $0xe0] sm:$0xf]
      %v350 = vld [vmem:[%s2 + $0xe4] sm:$0xf]
      %v351 = vld [vmem:[%s2 + $0xe8] sm:$0xf]
      %v352 = vld [vmem:[%s2 + $0xec] sm:$0xf]
      %v353 = vld [vmem:[%s2 + $0xf0] sm:$0xf]
      %v354 = vld [vmem:[%s2 + $0xf4] sm:$0xf]
      %v355 = vld [vmem:[%s2 + $0xf8] sm:$0xf]
      %v356 = vld [vmem:[%s2 + $0xfc] sm:$0xf]
      %v357 = vld [vmem:[%s2 + $0x100] sm:$0xf]
      %v358 = vld [vmem:[%s2 + $0x104] sm:$0xf]
      %v359 = vld [vmem:[%s2 + $0x108] sm:$0xf]
      %v360 = vld [vmem:[%s2 + $0x10c] sm:$0xf]
      %v361 = vld [vmem:[%s2 + $0x110] sm:$0xf]
      %v362 = vld [vmem:[%s2 + $0x114] sm:$0xf]
      %v363 = vld [vmem:[%s2 + $0x118] sm:$0xf]
      %v364 = vld [vmem:[%s2 + $0x11c] sm:$0xf]
      %v365 = vld [vmem:[%s2 + $0x120] sm:$0xf]
      %v366 = vld [vmem:[%s2 + $0x124] sm:$0xf]
      %v367 = vld [vmem:[%s2 + $0x128] sm:$0xf]
      %v368 = vld [vmem:[%s2 + $0x12c] sm:$0xf]
      %v369 = vld [vmem:[%s2 + $0x130] sm:$0xf]
      %v370 = vld [vmem:[%s2 + $0x134] sm:$0xf]
      %v371 = vld [vmem:[%s2 + $0x138] sm:$0xf]
      %v372 = vld [vmem:[%s2 + $0x13c] sm:$0xf]
      %v373 = vld [vmem:[%s2 + $0x140] sm:$0xf]
      %v374 = vld [vmem:[%s2 + $0x144] sm:$0xf]
      %v375 = vld [vmem:[%s2 + $0x148] sm:$0xf]
      %v376 = vld [vmem:[%s2 + $0x14c] sm:$0xf]
      %v377 = vld [vmem:[%s2 + $0x150] sm:$0xf]
      %v378 = vld [vmem:[%s2 + $0x154] sm:$0xf]
      %v379 = vld [vmem:[%s2 + $0x158] sm:$0xf]
      %v380 = vld [vmem:[%s2 + $0x15c] sm:$0xf]
      %v381 = vld [vmem:[%s2 + $0x160] sm:$0xf]
      %v382 = vld [vmem:[%s2 + $0x164] sm:$0xf]
      %v383 = vld [vmem:[%s2 + $0x168] sm:$0xf]
      %v384 = vld [vmem:[%s2 + $0x16c] sm:$0xf]
      %v385 = vld [vmem:[%s2 + $0x170] sm:$0xf]
      %v386 = vld [vmem:[%s2 + $0x174] sm:$0xf]
      %v387 = vld [vmem:[%s2 + $0x178] sm:$0xf]
      %v388 = vld [vmem:[%s2 + $0x17c] sm:$0xf]
      %v389 = vld [vmem:[%s3] sm:$0x1]
      %v391 = vlaneseq
      %v392 = vshrl.u32 %v391, 7
      %v393 = vsub.s32 0, %v392
      %v394 = vrot.slane %v389, %v393
      %v492 = vunpack.c.l.b16 %v293
      %v493 = vunpack.c.l.b16 %v294
      %v494 = vunpack.c.l.b16 %v295
      %v495 = vunpack.c.l.b16 %v296
      %v496 = vunpack.c.l.b16 %v297
      %v497 = vunpack.c.l.b16 %v298
      %v498 = vunpack.c.l.b16 %v299
      %v499 = vunpack.c.l.b16 %v300
      %v500 = vunpack.c.l.b16 %v301
      %v501 = vunpack.c.l.b16 %v302
      %v502 = vunpack.c.l.b16 %v303
      %v503 = vunpack.c.l.b16 %v304
      %v504 = vunpack.c.l.b16 %v305
      %v505 = vunpack.c.l.b16 %v306
      %v506 = vunpack.c.l.b16 %v307
      %v507 = vunpack.c.l.b16 %v308
      %v508 = vunpack.c.l.b16 %v309
      %v509 = vunpack.c.l.b16 %v310
      %v510 = vunpack.c.l.b16 %v311
      %v511 = vunpack.c.l.b16 %v312
      %v512 = vunpack.c.l.b16 %v313
      %v513 = vunpack.c.l.b16 %v314
      %v514 = vunpack.c.l.b16 %v315
      %v515 = vunpack.c.l.b16 %v316
      %v516 = vunpack.c.l.b16 %v317
      %v517 = vunpack.c.l.b16 %v318
      %v518 = vunpack.c.l.b16 %v319
      %v519 = vunpack.c.l.b16 %v320
      %v520 = vunpack.c.l.b16 %v321
      %v521 = vunpack.c.l.b16 %v322
      %v522 = vunpack.c.l.b16 %v323
      %v523 = vunpack.c.l.b16 %v324
      %v524 = vunpack.c.l.b16 %v325
      %v525 = vunpack.c.l.b16 %v326
      %v526 = vunpack.c.l.b16 %v327
      %v527 = vunpack.c.l.b16 %v328
      %v528 = vunpack.c.l.b16 %v329
      %v529 = vunpack.c.l.b16 %v330
      %v530 = vunpack.c.l.b16 %v331
      %v531 = vunpack.c.l.b16 %v332
      %v532 = vunpack.c.l.b16 %v333
      %v533 = vunpack.c.l.b16 %v334
      %v534 = vunpack.c.l.b16 %v335
      %v535 = vunpack.c.l.b16 %v336
      %v536 = vunpack.c.l.b16 %v337
      %v537 = vunpack.c.l.b16 %v338
      %v538 = vunpack.c.l.b16 %v339
      %v539 = vunpack.c.l.b16 %v340
      %v540 = vunpack.c.l.b16 %v341
      %v541 = vunpack.c.l.b16 %v342
      %v542 = vunpack.c.l.b16 %v343
      %v543 = vunpack.c.l.b16 %v344
      %v544 = vunpack.c.l.b16 %v345
      %v545 = vunpack.c.l.b16 %v346
      %v546 = vunpack.c.l.b16 %v347
      %v547 = vunpack.c.l.b16 %v348
      %v548 = vunpack.c.l.b16 %v349
      %v549 = vunpack.c.l.b16 %v350
      %v550 = vunpack.c.l.b16 %v351
      %v551 = vunpack.c.l.b16 %v352
      %v552 = vunpack.c.l.b16 %v353
      %v553 = vunpack.c.l.b16 %v354
      %v554 = vunpack.c.l.b16 %v355
      %v555 = vunpack.c.l.b16 %v356
      %v556 = vunpack.c.l.b16 %v357
      %v557 = vunpack.c.l.b16 %v358
      %v558 = vunpack.c.l.b16 %v359
      %v559 = vunpack.c.l.b16 %v360
      %v560 = vunpack.c.l.b16 %v361
      %v561 = vunpack.c.l.b16 %v362
      %v562 = vunpack.c.l.b16 %v363
      %v563 = vunpack.c.l.b16 %v364
      %v564 = vunpack.c.l.b16 %v365
      %v565 = vunpack.c.l.b16 %v366
      %v566 = vunpack.c.l.b16 %v367
      %v567 = vunpack.c.l.b16 %v368
      %v568 = vunpack.c.l.b16 %v369
      %v569 = vunpack.c.l.b16 %v370
      %v570 = vunpack.c.l.b16 %v371
      %v571 = vunpack.c.l.b16 %v372
      %v572 = vunpack.c.l.b16 %v373
      %v573 = vunpack.c.l.b16 %v374
      %v574 = vunpack.c.l.b16 %v375
      %v575 = vunpack.c.l.b16 %v376
      %v576 = vunpack.c.l.b16 %v377
      %v577 = vunpack.c.l.b16 %v378
      %v578 = vunpack.c.l.b16 %v379
      %v579 = vunpack.c.l.b16 %v380
      %v580 = vunpack.c.l.b16 %v381
      %v581 = vunpack.c.l.b16 %v382
      %v582 = vunpack.c.l.b16 %v383
      %v583 = vunpack.c.l.b16 %v384
      %v584 = vunpack.c.l.b16 %v385
      %v585 = vunpack.c.l.b16 %v386
      %v586 = vunpack.c.l.b16 %v387
      %v587 = vunpack.c.l.b16 %v388
      %v588 = vpack.c.b16 %v493, %v492
      %v589 = vpack.c.b16 %v495, %v494
      %v590 = vpack.c.b16 %v497, %v496
      %v591 = vpack.c.b16 %v499, %v498
      %v592 = vpack.c.b16 %v501, %v500
      %v593 = vpack.c.b16 %v503, %v502
      %v594 = vpack.c.b16 %v505, %v504
      %v595 = vpack.c.b16 %v507, %v506
      %v596 = vpack.c.b16 %v509, %v508
      %v597 = vpack.c.b16 %v511, %v510
      %v598 = vpack.c.b16 %v513, %v512
      %v599 = vpack.c.b16 %v515, %v514
      %v600 = vpack.c.b16 %v517, %v516
      %v601 = vpack.c.b16 %v519, %v518
      %v602 = vpack.c.b16 %v521, %v520
      %v603 = vpack.c.b16 %v523, %v522
      %v604 = vpack.c.b16 %v525, %v524
      %v605 = vpack.c.b16 %v527, %v526
      %v606 = vpack.c.b16 %v529, %v528
      %v607 = vpack.c.b16 %v531, %v530
      %v608 = vpack.c.b16 %v533, %v532
      %v609 = vpack.c.b16 %v535, %v534
      %v610 = vpack.c.b16 %v537, %v536
      %v611 = vpack.c.b16 %v539, %v538
      %v612 = vpack.c.b16 %v541, %v540
      %v613 = vpack.c.b16 %v543, %v542
      %v614 = vpack.c.b16 %v545, %v544
      %v615 = vpack.c.b16 %v547, %v546
      %v616 = vpack.c.b16 %v549, %v548
      %v617 = vpack.c.b16 %v551, %v550
      %v618 = vpack.c.b16 %v553, %v552
      %v619 = vpack.c.b16 %v555, %v554
      %v620 = vpack.c.b16 %v557, %v556
      %v621 = vpack.c.b16 %v559, %v558
      %v622 = vpack.c.b16 %v561, %v560
      %v623 = vpack.c.b16 %v563, %v562
      %v624 = vpack.c.b16 %v565, %v564
      %v625 = vpack.c.b16 %v567, %v566
      %v626 = vpack.c.b16 %v569, %v568
      %v627 = vpack.c.b16 %v571, %v570
      %v628 = vpack.c.b16 %v573, %v572
      %v629 = vpack.c.b16 %v575, %v574
      %v630 = vpack.c.b16 %v577, %v576
      %v631 = vpack.c.b16 %v579, %v578
      %v632 = vpack.c.b16 %v581, %v580
      %v633 = vpack.c.b16 %v583, %v582
      %v634 = vpack.c.b16 %v585, %v584
      %v635 = vpack.c.b16 %v587, %v586
      %684 = vmatprep.subr.bf16.mxu0 0
      %685 = vmatpush1.bf16.msra.mxu0 %v595
      %686 = vmatprep.subr.bf16.mxu0 0
      %687 = vmatpush1.bf16.msra.mxu0 %v594
      %688 = vmatprep.subr.bf16.mxu0 0
      %689 = vmatpush1.bf16.msra.mxu0 %v593
      %690 = vmatprep.subr.bf16.mxu0 0
      %691 = vmatpush1.bf16.msra.mxu0 %v592
      %692 = vmatprep.subr.bf16.mxu0 0
      %693 = vmatpush1.bf16.msra.mxu0 %v591
      %694 = vmatprep.subr.bf16.mxu0 0
      %695 = vmatpush1.bf16.msra.mxu0 %v590
      %696 = vmatprep.subr.bf16.mxu0 0
      %697 = vmatpush1.bf16.msra.mxu0 %v589
      %698 = vmatprep.subr.bf16.mxu0 0
      %699 = vmatpush1.bf16.msra.mxu0 %v588
      %700 = vmatprep.subr.bf16.mxu0 0
      %701 = vmatpush2.bf16.msra.mxu0 %v603
      %702 = vmatprep.subr.bf16.mxu0 0
      %703 = vmatpush2.bf16.msra.mxu0 %v602
      %704 = vmatprep.subr.bf16.mxu0 0
      %705 = vmatpush2.bf16.msra.mxu0 %v601
      %706 = vmatprep.subr.bf16.mxu0 0
      %707 = vmatpush2.bf16.msra.mxu0 %v600
      %708 = vmatprep.subr.bf16.mxu0 0
      %709 = vmatpush2.bf16.msra.mxu0 %v599
      %710 = vmatprep.subr.bf16.mxu0 0
      %711 = vmatpush2.bf16.msra.mxu0 %v598
      %712 = vmatprep.subr.bf16.mxu0 0
      %713 = vmatpush2.bf16.msra.mxu0 %v597
      %714 = vmatprep.subr.bf16.mxu0 0
      %715 = vmatpush2.bf16.msra.mxu0 %v596
      %716 = vmatprep.mubr.bf16.mxu0 %v288
      %717 = vmatmul.mubr.bf16.gmra.mxu0 %v287
      %v718 = vpop.f32.mrf.mxu0
      %v719 = vadd.f32 %v394, %v718
      %v720 = vpop.f32.mrf.mxu0
      %v721 = vpop.f32.mrf.mxu0
      %v722 = vadd.f32 %v394, %v721
      %v723 = vpop.f32.mrf.mxu0
      %724 = vdwg.mxu0
      %725 = vmatprep.subr.bf16.mxu0 0
      %726 = vmatpush1.bf16.msra.mxu0 %v611
      %727 = vmatprep.subr.bf16.mxu0 0
      %728 = vmatpush1.bf16.msra.mxu0 %v610
      %729 = vmatprep.subr.bf16.mxu0 0
      %730 = vmatpush1.bf16.msra.mxu0 %v609
      %731 = vmatprep.subr.bf16.mxu0 0
      %732 = vmatpush1.bf16.msra.mxu0 %v608
      %733 = vmatprep.subr.bf16.mxu0 0
      %734 = vmatpush1.bf16.msra.mxu0 %v607
      %735 = vmatprep.subr.bf16.mxu0 0
      %736 = vmatpush1.bf16.msra.mxu0 %v606
      %737 = vmatprep.subr.bf16.mxu0 0
      %738 = vmatpush1.bf16.msra.mxu0 %v605
      %739 = vmatprep.subr.bf16.mxu0 0
      %740 = vmatpush1.bf16.msra.mxu0 %v604
      %741 = vmatprep.subr.bf16.mxu0 0
      %742 = vmatpush2.bf16.msra.mxu0 %v619
      %743 = vmatprep.subr.bf16.mxu0 0
      %744 = vmatpush2.bf16.msra.mxu0 %v618
      %745 = vmatprep.subr.bf16.mxu0 0
      %746 = vmatpush2.bf16.msra.mxu0 %v617
      %747 = vmatprep.subr.bf16.mxu0 0
      %748 = vmatpush2.bf16.msra.mxu0 %v616
      %749 = vmatprep.subr.bf16.mxu0 0
      %750 = vmatpush2.bf16.msra.mxu0 %v615
      %751 = vmatprep.subr.bf16.mxu0 0
      %752 = vmatpush2.bf16.msra.mxu0 %v614
      %753 = vmatprep.subr.bf16.mxu0 0
      %754 = vmatpush2.bf16.msra.mxu0 %v613
      %755 = vmatprep.subr.bf16.mxu0 0
      %756 = vmatpush2.bf16.msra.mxu0 %v612
      %757 = vmatprep.mubr.bf16.mxu0 %v290
      %758 = vmatmul.mubr.bf16.gmra.mxu0 %v289
      %v759 = vpop.f32.mrf.mxu0
      %v760 = vadd.f32 %v719, %v759
      %v761 = vpop.f32.mrf.mxu0
      %v762 = vpop.f32.mrf.mxu0
      %v763 = vadd.f32 %v722, %v762
      %v764 = vpop.f32.mrf.mxu0
      %765 = vdwg.mxu0
      %766 = vmatprep.subr.bf16.mxu0 0
      %767 = vmatpush1.bf16.msra.mxu0 %v627
      %768 = vmatprep.subr.bf16.mxu0 0
      %769 = vmatpush1.bf16.msra.mxu0 %v626
      %770 = vmatprep.subr.bf16.mxu0 0
      %771 = vmatpush1.bf16.msra.mxu0 %v625
      %772 = vmatprep.subr.bf16.mxu0 0
      %773 = vmatpush1.bf16.msra.mxu0 %v624
      %774 = vmatprep.subr.bf16.mxu0 0
      %775 = vmatpush1.bf16.msra.mxu0 %v623
      %776 = vmatprep.subr.bf16.mxu0 0
      %777 = vmatpush1.bf16.msra.mxu0 %v622
      %778 = vmatprep.subr.bf16.mxu0 0
      %779 = vmatpush1.bf16.msra.mxu0 %v621
      %780 = vmatprep.subr.bf16.mxu0 0
      %781 = vmatpush1.bf16.msra.mxu0 %v620
      %782 = vmatprep.subr.bf16.mxu0 0
      %783 = vmatpush2.bf16.msra.mxu0 %v635
      %784 = vmatprep.subr.bf16.mxu0 0
      %785 = vmatpush2.bf16.msra.mxu0 %v634
      %786 = vmatprep.subr.bf16.mxu0 0
      %787 = vmatpush2.bf16.msra.mxu0 %v633
      %788 = vmatprep.subr.bf16.mxu0 0
      %789 = vmatpush2.bf16.msra.mxu0 %v632
      %790 = vmatprep.subr.bf16.mxu0 0
      %791 = vmatpush2.bf16.msra.mxu0 %v631
      %792 = vmatprep.subr.bf16.mxu0 0
      %793 = vmatpush2.bf16.msra.mxu0 %v630
      %794 = vmatprep.subr.bf16.mxu0 0
      %795 = vmatpush2.bf16.msra.mxu0 %v629
      %796 = vmatprep.subr.bf16.mxu0 0
      %797 = vmatpush2.bf16.msra.mxu0 %v628
      %798 = vmatprep.mubr.bf16.mxu0 %v292
      %799 = vmatmul.mubr.bf16.gmra.mxu0 %v291
      %v800 = vpop.f32.mrf.mxu0
      %v801 = vadd.f32 %v760, %v800
      %v802 = vpop.f32.mrf.mxu0
      %v803 = vpop.f32.mrf.mxu0
      %v804 = vadd.f32 %v763, %v803
      %v805 = vpop.f32.mrf.mxu0
      %806 = vdwg.mxu0
      %vm807 = vcmask 261120
      %v808 = vsel %vm807, %v801, -inf
      %809 = vmax.xlane.f32.xlu0 %v808
      %v810 = vpop.xlane.xlu0 %809
      %v811 = vsel %vm807, %v804, -inf
      %812 = vmax.xlane.f32.xlu0 %v811
      %v813 = vpop.xlane.xlu0 %812
      %v814 = vsub.f32 %v801, %v810
      %v815 = vsub.f32 %v804, %v813
      %v816 = vmul.f32 %v814, 1.442695
      %v817 = vpow.pop %v816
      %v818 = vmul.f32 %v815, 1.442695
      %v819 = vpow.pop %v818
      %v820 = vsel %vm807, %v817, 0.0
      %821 = vadd.xlane.f32.xlu0 %v820
      %v822 = vpop.xlane.xlu0 %821
      %v823 = vsel %vm807, %v819, 0.0
      %824 = vadd.xlane.f32.xlu0 %v823
      %v825 = vpop.xlane.xlu0 %824
      %v826 = vlog2.pop %v822
      %v827 = vmul.f32 %v826, 0.6931472
      %v828 = vlog2.pop %v825
      %v829 = vmul.f32 %v828, 0.6931472
      %v830 = vadd.f32 %v810, %v827
      %v831 = vadd.f32 %v813, %v829
      %v832 = vlaneseq
      %v833 = vand.u32 %v832, 127
      %v834 = vld [vmem:[%s251] sm:$0xff]
      %v835 = vld [vmem:[%s251 + $0x8] sm:$0xff]
      %836 = vset.pattern.permute.xlu0 0
      %837 = vperm.xlu0 %836, %v834
      %v838 = vpop.permute.xlu0 %837
      %839 = vset.pattern.permute.xlu0 0
      %840 = vperm.xlu0 %839, %v835
      %v841 = vpop.permute.xlu0 %840
      %vm842 = vcmp.eq.s32.totalorder %v833, %v838
      %vm843 = vcmp.eq.s32.totalorder %v833, %v841
      %v844 = vsel %vm842, 1, 0
      %v845 = vsel %vm843, 1, 0
      %v846 = vcvt.s32.f32 %v844
      %v847 = vcvt.s32.f32 %v845
      %v848 = vmul.f32 %v846, %v801
      %v849 = vmul.f32 %v847, %v804
      %v850 = vsel %vm807, %v848, 0.0
      %851 = vadd.xlane.f32.xlu0 %v850
      %v852 = vpop.xlane.xlu0 %851
      %v853 = vsel %vm807, %v849, 0.0
      %854 = vadd.xlane.f32.xlu0 %v853
      %v855 = vpop.xlane.xlu0 %854
      %v856 = vsub.f32 %v830, %v852
      %v857 = vsub.f32 %v831, %v855
      %v858 = vadd.f32 %v856, %v857
      %v859 = vrot.slane %v858, 4
      %v860 = vadd.f32 %v858, %v859
      %v861 = vrot.slane %v860, 2
      %v862 = vadd.f32 %v860, %v861
      %v863 = vrot.slane %v862, 1
      %v864 = vadd.f32 %v862, %v863
      %vm865 = vcmask 0
      %866 = vst.msk [vmem:[%s255] sm:$0x1] %vm865, %v864
      %vm867 = vcmp.eq.f32.partialorder %v801, %v810
      %vm868 = vcmp.eq.f32.partialorder %v804, %v813
      %v869 = vsel %vm867, %v833, 1073741824
      %v870 = vsel %vm868, %v833, 1073741824
      %v871 = vsel %vm807, %v869, 2147483647
      %v872 = vand.u32 %v871, 65535
      %v873 = vshra.s32 %v871, 16
      %v874 = vcvt.s32.f32 %v872
      %v875 = vcvt.s32.f32 %v873
      %876 = vmin.xlane.f32.xlu0 %v875
      %v877 = vpop.xlane.xlu0 %876
      %vm878 = vcmp.eq.f32.partialorder %v875, %v877
      %v879 = vsel %vm878, %v874, inf
      %880 = vmin.xlane.f32.xlu0 %v879
      %v881 = vpop.xlane.xlu0 %880
      %v882 = vcvt.f32.s32 %v881
      %v883 = vcvt.f32.s32 %v877
      %v884 = vshll.u32 %v883, 16
      %v885 = vadd.s32 %v884, %v882
      %v886 = vsel %vm807, %v870, 2147483647
      %v887 = vand.u32 %v886, 65535
      %v888 = vshra.s32 %v886, 16
      %v889 = vcvt.s32.f32 %v887
      %v890 = vcvt.s32.f32 %v888
      %891 = vmin.xlane.f32.xlu0 %v890
      %v892 = vpop.xlane.xlu0 %891
      %vm893 = vcmp.eq.f32.partialorder %v890, %v892
      %v894 = vsel %vm893, %v889, inf
      %895 = vmin.xlane.f32.xlu0 %v894
      %v896 = vpop.xlane.xlu0 %895
      %v897 = vcvt.f32.s32 %v896
      %v898 = vcvt.f32.s32 %v892
      %v899 = vshll.u32 %v898, 16
      %v900 = vadd.s32 %v899, %v897
      %vm901 = vcmask 7168
      %902 = vst.msk [vmem:[%s260] sm:$0xff] %vm901, %v885
      %903 = vst.msk [vmem:[%s260 + $0x8] sm:$0xff] %vm901, %v900
      %p904 = scmp.lt.s32.totalorder %s17, 1
      %s905 = scalar_select %p904, %s17, 1
      %s906 = scalar_lea.vmem %s4, %s905
      %s907 = smul.u32 2, %s17
      %p908 = scmp.lt.s32.totalorder %s907, 3
      %s909 = scalar_select %p908, %s907, 3
      %s910 = smul.addr %s909, 8
      %s911 = scalar_lea.vmem %s5, %s910
      // Predicated region
      $region37: #{tpu_custom_call.1} parent=35 // pred_check
        %p912 = pneg %p129
      $region38: #{tpu_custom_call.1} parent=35 // pred_check_branch
        %914 = sbr.rel (%p912) target = $region40
      $region39: #{tpu_custom_call.1} parent=35 // pred_region
        _
      $region40: #{tpu_custom_call.1} parent=35 // pred_fallthru
        _
      // Predicated region
      $region41: #{tpu_custom_call.1} parent=35 // pred_check
        %p915 = pneg %p155
      $region42: #{tpu_custom_call.1} parent=35 // pred_check_branch
        %917 = sbr.rel (%p915) target = $region44
      $region43: #{tpu_custom_call.1} parent=35 // pred_region
        %s918 = smul.u32 2, %s17
      $region44: #{tpu_custom_call.1} parent=35 // pred_fallthru
        _
    $region36: #{tpu_custom_call.1} parent=5 // pred_fallthru
      _
    %p919 = scmp.le.s32.totalorder 2, %s12
    // Predicated region
    $region45: #{tpu_custom_call.1} parent=5 // pred_check
      %p920 = pneg %p919
    $region46: #{tpu_custom_call.1} parent=5 // pred_check_branch
      %922 = sbr.rel (%p920) target = $region48
    $region47: #{tpu_custom_call.1} parent=5 // pred_region
      %s923 = ssub.s32 %s12, 2
      // Predicated region
      $region49: #{tpu_custom_call.1} parent=47 // pred_check
        %p924 = pneg %p135
      $region50: #{tpu_custom_call.1} parent=47 // pred_check_branch
        %926 = sbr.rel (%p924) target = $region52
      $region51: #{tpu_custom_call.1} parent=47 // pred_region
        %p927 = scmp.lt.s32.totalorder %s18, 1
        %s928 = scalar_select %p927, %s18, 1
        %s929 = scalar_lea.vmem %s4, %s928
      $region52: #{tpu_custom_call.1} parent=47 // pred_fallthru
        _
      // Predicated region
      $region53: #{tpu_custom_call.1} parent=47 // pred_check
        %p930 = pneg %p161
      $region54: #{tpu_custom_call.1} parent=47 // pred_check_branch
        %932 = sbr.rel (%p930) target = $region56
      $region55: #{tpu_custom_call.1} parent=47 // pred_region
        %s933 = smul.u32 2, %s18
        %p934 = scmp.lt.s32.totalorder %s933, 3
        %s935 = scalar_select %p934, %s933, 3
        %s936 = smul.addr %s935, 8
        %s937 = scalar_lea.vmem %s5, %s936
      $region56: #{tpu_custom_call.1} parent=47 // pred_fallthru
        _
    $region48: #{tpu_custom_call.1} parent=5 // pred_fallthru
      _
  $region6: #{tpu_custom_call.1} parent=0 // loop_footer
    %s16 = sadd.s32 1, %s12
  $region7: #{tpu_custom_call.1} parent=0 // loop_footer_branch
    %11 = sbr.rel target = $region3
  $region8: #{tpu_custom_call.1} parent=0 // loop_exit
    _

</llo_original>
